<compile_context>
chip_gen: v5e
topology: v5e:2x2
jax: 0.10.0
libtpu: 0.0.40
codegen_flags: <defaults>
</compile_context>

<pallas_src>
import functools

import jax
import jax.numpy as jnp
from jax.experimental import pallas as pl
from jax.experimental.pallas import tpu as pltpu


# ----------------------------------------------------------------------------
# Fused path: whole graph resident in VMEM, all layers in one kernel.
# ----------------------------------------------------------------------------
def gcn_fused_kernel(a_ref, x_ref, w_ref, b_ref, o_ref, *, num_conv):
    # a_ref: (N, N) bf16 normalized adjacency (DMA'd from HBM exactly once)
    # x_ref: (N, E) f32 node features
    # w_ref: (E, E) f32 shared weight, b_ref: (1, E) f32 shared bias
    # o_ref: (N, E) f32 output (only the final H is written back to HBM)
    a = a_ref[...]
    w = w_ref[...]
    b = b_ref[...]
    h = x_ref[...]
    for i in range(num_conv):
        ah = jnp.dot(a, h.astype(jnp.bfloat16),
                     preferred_element_type=jnp.float32)   # bf16 MXU, f32 acc
        z = jnp.dot(ah, w, preferred_element_type=jnp.float32) + b
        h = jnp.maximum(z, 0.0) if i < num_conv - 1 else z
    o_ref[...] = h


def gcn_fused(a_bf16, x, w, b, num_conv):
    n, e = x.shape
    return pl.pallas_call(
        functools.partial(gcn_fused_kernel, num_conv=num_conv),
        out_shape=jax.ShapeDtypeStruct((n, e), jnp.float32),
        compiler_params=pltpu.CompilerParams(
            vmem_limit_bytes=64 * 1024 * 1024),
    )(a_bf16, x, w, b.reshape(1, e))


# ----------------------------------------------------------------------------
# Tiled per-layer path (large graphs that do not fit in VMEM).
# ----------------------------------------------------------------------------
def gcn_layer_kernel(a_ref, h_ref, w_ref, b_ref, o_ref, *, apply_relu):
    # a_ref: (tn, tk) bf16 tile of Â       (the streamed, HBM-bound operand)
    # h_ref: (tk, E)  bf16 tile of H
    # w_ref: (E, E)   f32 shared weight,  b_ref: (1, E) f32 shared bias
    # o_ref: (tn, E)  f32 output block, resident across the k (reduction) axis
    k = pl.program_id(1)

    @pl.when(k == 0)
    def _():
        o_ref[...] = jnp.zeros_like(o_ref)

    # Â @ H accumulated directly into the resident f32 output block
    # (no separate VMEM scratch accumulator).
    o_ref[...] += jnp.dot(a_ref[...], h_ref[...],
                          preferred_element_type=jnp.float32)

    @pl.when(k == pl.num_programs(1) - 1)
    def _():
        z = jnp.dot(o_ref[...], w_ref[...],
                    preferred_element_type=jnp.float32) + b_ref[...]
        if apply_relu:
            z = jnp.maximum(z, 0.0)
        o_ref[...] = z


def _pick_tile(n, target, align):
    """Largest multiple of `align` dividing n that is <= target (else n)."""
    if n <= target:
        return n
    best = None
    t = align
    while t <= target:
        if n % t == 0:
            best = t
        t += align
    return best if best is not None else n


def gcn_layer(a_bf16, h, w, b, *, apply_relu, tn=None, tk=None):
    """One GraphConv layer: (ReLU)(Â @ h @ W + b), tiled over (rows, reduction)."""
    n, e = h.shape
    assert a_bf16.shape == (n, n)
    tn = tn if tn is not None else _pick_tile(n, 512, 8)
    tk = tk if tk is not None else _pick_tile(n, 1024, 128)
    assert n % tn == 0 and n % tk == 0
    kernel = functools.partial(gcn_layer_kernel, apply_relu=apply_relu)
    return pl.pallas_call(
        kernel,
        out_shape=jax.ShapeDtypeStruct((n, e), jnp.float32),
        grid_spec=pltpu.PrefetchScalarGridSpec(
            num_scalar_prefetch=0,
            grid=(n // tn, n // tk),
            in_specs=[
                pl.BlockSpec((tn, tk), lambda i, k: (i, k)),   # Â tile (streamed)
                pl.BlockSpec((tk, e), lambda i, k: (k, 0)),    # H tile
                pl.BlockSpec((e, e), lambda i, k: (0, 0)),     # W (grid-invariant)
                pl.BlockSpec((1, e), lambda i, k: (0, 0)),     # b (grid-invariant)
            ],
            out_specs=pl.BlockSpec((tn, e), lambda i, k: (i, 0)),
        ),
        compiler_params=pltpu.CompilerParams(
            dimension_semantics=("parallel", "arbitrary"),
            vmem_limit_bytes=64 * 1024 * 1024),
    )(a_bf16, h.astype(jnp.bfloat16), w, b.reshape(1, e))


def gcn_forward(a_hat, x, w, b, num_conv, *, force_tiled=False, tn=None, tk=None):
    """GCN.forward: num_conv shared GraphConv layers, ReLU between all but last."""
    n, e = x.shape
    a_bf16 = a_hat.astype(jnp.bfloat16)
    # Rough VMEM footprint of the fused kernel: bf16 Â + a few (N,E) f32 live
    # values + W; stay well under the smallest scoped default (v5e: 16 MiB).
    fused_bytes = n * n * 2 + 4 * n * e * 4 + e * e * 4
    if not force_tiled and fused_bytes <= 12 * 1024 * 1024:
        return gcn_fused(a_bf16, x, w, b, num_conv)
    h = x
    for i in range(num_conv):
        h = gcn_layer(a_bf16, h, w, b,
                      apply_relu=(i < num_conv - 1), tn=tn, tk=tk)
    return h


if __name__ == "__main__":
    key = jax.random.PRNGKey(0)
    k_adj, k_x, k_w, k_b = jax.random.split(key, 4)

    num_nodes = 256
    embed_size = 128
    num_conv = 3

    # Synthetic undirected graph with self-loops, symmetric GCN normalization.
    adj = (jax.random.uniform(k_adj, (num_nodes, num_nodes)) < 0.05).astype(jnp.float32)
    adj = jnp.maximum(adj, adj.T)
    adj = jnp.maximum(adj, jnp.eye(num_nodes, dtype=jnp.float32))
    deg = adj.sum(axis=1)
    d_inv_sqrt = 1.0 / jnp.sqrt(deg)
    a_hat = adj * d_inv_sqrt[:, None] * d_inv_sqrt[None, :]

    # Shared GraphConv parameters (the PyTorch list aliases one module).
    w = jax.random.normal(k_w, (embed_size, embed_size), dtype=jnp.float32)
    w = w * (1.0 / jnp.sqrt(embed_size))
    b = jax.random.normal(k_b, (embed_size,), dtype=jnp.float32) * 0.1

    # Node features.
    x = jax.random.normal(k_x, (num_nodes, embed_size), dtype=jnp.float32)

    # Fused (benchmark-size) path.
    y_fused = jax.block_until_ready(gcn_forward(a_hat, x, w, b, num_conv))
    # Tiled per-layer path (large-graph fallback), exercised with a real grid.
    y_tiled = jax.block_until_ready(
        gcn_forward(a_hat, x, w, b, num_conv, force_tiled=True, tn=128, tk=128))

    # Pure-JAX reference with matching numerics (bf16 MXU inputs, f32 accum).
    with jax.default_matmul_precision("float32"):
        a_bf = a_hat.astype(jnp.bfloat16)
        h = x
        for i in range(num_conv):
            ah = jnp.dot(a_bf, h.astype(jnp.bfloat16),
                         preferred_element_type=jnp.float32)
            z = jnp.dot(ah, w, preferred_element_type=jnp.float32) + b
            h = jnp.maximum(z, 0.0) if i < num_conv - 1 else z
        y_ref = h

    assert y_fused.shape == (num_nodes, embed_size)
    assert y_tiled.shape == (num_nodes, embed_size)
    err_fused = float(jnp.max(jnp.abs(y_fused - y_ref)))
    err_tiled = float(jnp.max(jnp.abs(y_tiled - y_ref)))
    assert jnp.allclose(y_fused, y_ref, atol=1e-2, rtol=1e-2), err_fused
    assert jnp.allclose(y_tiled, y_ref, atol=1e-2, rtol=1e-2), err_tiled

    print("KERNEL_OK")
</pallas_src>

<mosaic_0001>
module attributes {stable_mosaic.version = 11 : i64} {
  func.func @gcn_fused_kernel(%arg0: memref<256x256xbf16, #tpu.memory_space<vmem>>, %arg1: memref<256x128xf32, #tpu.memory_space<vmem>>, %arg2: memref<128x128xf32, #tpu.memory_space<vmem>>, %arg3: memref<1x128xf32, #tpu.memory_space<vmem>>, %arg4: memref<256x128xf32, #tpu.memory_space<vmem>>) attributes {dimension_semantics = [], scalar_prefetch = 0 : i64, scratch_operands = 0 : i64, tpu.core_type = #tpu.core_type<tc>} {
    %c0 = arith.constant 0 : index
    %c0_0 = arith.constant 0 : index
    %0 = vector.load %arg0[%c0, %c0_0] : memref<256x256xbf16, #tpu.memory_space<vmem>>, vector<256x256xbf16>
    %c0_1 = arith.constant 0 : index
    %c0_2 = arith.constant 0 : index
    %1 = vector.load %arg2[%c0_1, %c0_2] : memref<128x128xf32, #tpu.memory_space<vmem>>, vector<128x128xf32>
    %c0_3 = arith.constant 0 : index
    %c0_4 = arith.constant 0 : index
    %2 = vector.load %arg3[%c0_3, %c0_4] : memref<1x128xf32, #tpu.memory_space<vmem>>, vector<1x128xf32>
    %c0_5 = arith.constant 0 : index
    %c0_6 = arith.constant 0 : index
    %3 = vector.load %arg1[%c0_5, %c0_6] : memref<256x128xf32, #tpu.memory_space<vmem>>, vector<256x128xf32>
    %4 = arith.truncf %3 : vector<256x128xf32> to vector<256x128xbf16>
    %cst = arith.constant dense<0.000000e+00> : vector<256x128xf32>
    %5 = tpu.matmul %0, %4, %cst {dimension_numbers = #tpu.dot_dimension_numbers<[1], [0], [0], [1], [0, 0, 1, 1], [], []>} : vector<256x256xbf16>, vector<256x128xbf16>, vector<256x128xf32> -> vector<256x128xf32>
    %cst_7 = arith.constant dense<0.000000e+00> : vector<256x128xf32>
    %6 = tpu.matmul %5, %1, %cst_7 {dimension_numbers = #tpu.dot_dimension_numbers<[1], [0], [0], [1], [0, 0, 1, 1], [], []>} : vector<256x128xf32>, vector<128x128xf32>, vector<256x128xf32> -> vector<256x128xf32>
    %7 = vector.broadcast %2 : vector<1x128xf32> to vector<256x128xf32>
    %8 = arith.addf %6, %7 : vector<256x128xf32>
    %cst_8 = arith.constant 0.000000e+00 : f32
    %9 = vector.broadcast %cst_8 : f32 to vector<256x128xf32>
    %10 = arith.maximumf %8, %9 : vector<256x128xf32>
    %11 = arith.truncf %10 : vector<256x128xf32> to vector<256x128xbf16>
    %cst_9 = arith.constant dense<0.000000e+00> : vector<256x128xf32>
    %12 = tpu.matmul %0, %11, %cst_9 {dimension_numbers = #tpu.dot_dimension_numbers<[1], [0], [0], [1], [0, 0, 1, 1], [], []>} : vector<256x256xbf16>, vector<256x128xbf16>, vector<256x128xf32> -> vector<256x128xf32>
    %cst_10 = arith.constant dense<0.000000e+00> : vector<256x128xf32>
    %13 = tpu.matmul %12, %1, %cst_10 {dimension_numbers = #tpu.dot_dimension_numbers<[1], [0], [0], [1], [0, 0, 1, 1], [], []>} : vector<256x128xf32>, vector<128x128xf32>, vector<256x128xf32> -> vector<256x128xf32>
    %14 = vector.broadcast %2 : vector<1x128xf32> to vector<256x128xf32>
    %15 = arith.addf %13, %14 : vector<256x128xf32>
    %cst_11 = arith.constant 0.000000e+00 : f32
    %16 = vector.broadcast %cst_11 : f32 to vector<256x128xf32>
    %17 = arith.maximumf %15, %16 : vector<256x128xf32>
    %18 = arith.truncf %17 : vector<256x128xf32> to vector<256x128xbf16>
    %cst_12 = arith.constant dense<0.000000e+00> : vector<256x128xf32>
    %19 = tpu.matmul %0, %18, %cst_12 {dimension_numbers = #tpu.dot_dimension_numbers<[1], [0], [0], [1], [0, 0, 1, 1], [], []>} : vector<256x256xbf16>, vector<256x128xbf16>, vector<256x128xf32> -> vector<256x128xf32>
    %cst_13 = arith.constant dense<0.000000e+00> : vector<256x128xf32>
    %20 = tpu.matmul %19, %1, %cst_13 {dimension_numbers = #tpu.dot_dimension_numbers<[1], [0], [0], [1], [0, 0, 1, 1], [], []>} : vector<256x128xf32>, vector<128x128xf32>, vector<256x128xf32> -> vector<256x128xf32>
    %21 = vector.broadcast %2 : vector<1x128xf32> to vector<256x128xf32>
    %22 = arith.addf %20, %21 : vector<256x128xf32>
    %c0_14 = arith.constant 0 : index
    %c0_15 = arith.constant 0 : index
    %23 = vector.load %arg4[%c0_14, %c0_15] : memref<256x128xf32, #tpu.memory_space<vmem>>, vector<256x128xf32>
    tpu.vector_store %arg4[%c0_14, %c0_15], %22 {strides = array<i32>} : memref<256x128xf32, #tpu.memory_space<vmem>>, vector<256x128xf32>,
    return
  }
}

</mosaic_0001>

<llo_original>
// kernel: tpu_custom_call.1
$region0: #{tpu_custom_call.1}
  #allocation0 [shape = 'u32[]', space=smem, size = 0x4, offset = 0x4, fixed_abs, tag = 'smem constant byte address 0x4 - core index']
  #allocation1 [shape = 'u32[72,128]{1,0:T(1,128)}', space=vmem, size = 0x9000, scoped, tag = 'internal scratch']
  %s0 = inlined_call_operand.hbm [shape: bf16[256,256], index: 0, kind: input, shape index: {}]
  %s1 = inlined_call_operand.hbm [shape: f32[256,128], index: 1, kind: input, shape index: {}]
  %s2 = inlined_call_operand.hbm [shape: f32[128,128], index: 2, kind: input, shape index: {}]
  %s3 = inlined_call_operand.vmem [shape: f32[1,128], index: 3, kind: input, shape index: {}]
  %s4 = inlined_call_operand.hbm [shape: f32[256,128], index: 4, kind: output, shape index: {}]
  %s5 = sld [smem:[#allocation0]]
  $region38: #{tpu_custom_call.1} parent=0
    _
  %s7 = ssub.s32 1, %s5
  %s8 = scalar_select 0, %s7, %s5
  $region1: #{tpu_custom_call.1} parent=0
    #allocation2 [shape = 'u8[131072]{0}', space=vmem, size = 0x20000, scoped, tag = 'input window, operand 0, single buffered']
    #allocation3 [shape = 's32[1]{0}', space=sflag, size = 0x4, scoped, tag = 'scoped memory for tpu_custom_call.1']
    #allocation4 [shape = 's32[1]{0}', space=sflag, size = 0x4, scoped, tag = 'scoped memory for tpu_custom_call.1']
    #allocation5 [shape = 'u8[131072]{0}', space=vmem, size = 0x20000, scoped, tag = 'input window, operand 1, single buffered']
    #allocation6 [shape = 's32[1]{0}', space=sflag, size = 0x4, scoped, tag = 'scoped memory for tpu_custom_call.1']
    #allocation7 [shape = 'u8[65536]{0}', space=vmem, size = 0x10000, scoped, tag = 'input window, operand 2, single buffered']
    #allocation8 [shape = 'u8[131072]{0}', space=vmem, size = 0x20000, scoped, tag = 'output window, operand 0, single buffered']
    %9 = vsyncpa [#allocation3], 0
    %10 = vsyncpa [#allocation6], 0
    %11 = vsyncpa [#allocation4], 0
    // Predicated region
    $region2: #{tpu_custom_call.1} parent=1 // pred_check
      _
    $region3: #{tpu_custom_call.1} parent=1 // pred_check_branch
      %13 = sbr.rel (0) target = $region5
    $region4: #{tpu_custom_call.1} parent=1 // pred_region
      %15 = vsyncadd [#allocation3], 0
      %s16 = sshll.u32 %s0, 4
      %s17 = int_to_ptr.hbm [resolvable:$true] %s16
      %s18 = sshll.u32 [#allocation2], 4
      %s19 = int_to_ptr.vmem [resolvable:$true] %s18
      %24 = dma.hbm_to_vmem [thread:$0]  %s17, 4096, %s19, [#allocation3], 128, 128, 8
    $region5: #{tpu_custom_call.1} parent=1 // pred_fallthru
      _
    // Predicated region
    $region6: #{tpu_custom_call.1} parent=1 // pred_check
      _
    $region7: #{tpu_custom_call.1} parent=1 // pred_check_branch
      %26 = sbr.rel (0) target = $region9
    $region8: #{tpu_custom_call.1} parent=1 // pred_region
      %28 = vsyncadd [#allocation6], 0
      %s29 = sshll.u32 %s1, 4
      %s30 = int_to_ptr.hbm [resolvable:$true] %s29
      %s31 = sshll.u32 [#allocation5], 4
      %s32 = int_to_ptr.vmem [resolvable:$true] %s31
      %37 = dma.hbm_to_vmem [thread:$0]  %s30, 4096, %s32, [#allocation6], 128, 128, 8
    $region9: #{tpu_custom_call.1} parent=1 // pred_fallthru
      _
    // Predicated region
    $region10: #{tpu_custom_call.1} parent=1 // pred_check
      _
    $region11: #{tpu_custom_call.1} parent=1 // pred_check_branch
      %39 = sbr.rel (0) target = $region13
    $region12: #{tpu_custom_call.1} parent=1 // pred_region
      %41 = vsyncadd [#allocation6], 0
      %s42 = sshll.u32 %s2, 4
      %s43 = int_to_ptr.hbm [resolvable:$true] %s42
      %s44 = sshll.u32 [#allocation7], 4
      %s45 = int_to_ptr.vmem [resolvable:$true] %s44
      %50 = dma.hbm_to_vmem [thread:$0]  %s43, 2048, %s45, [#allocation6], 128, 128, 8
    $region13: #{tpu_custom_call.1} parent=1 // pred_fallthru
      _
    // Predicated region
    $region14: #{tpu_custom_call.1} parent=1 // pred_check
      _
    $region15: #{tpu_custom_call.1} parent=1 // pred_check_branch
      %52 = sbr.rel (0) target = $region17
    $region16: #{tpu_custom_call.1} parent=1 // pred_region
      _
    $region17: #{tpu_custom_call.1} parent=1 // pred_fallthru
      _
    // Predicated region
    $region18: #{tpu_custom_call.1} parent=1 // pred_check
      _
    $region19: #{tpu_custom_call.1} parent=1 // pred_check_branch
      %54 = sbr.rel (0) target = $region21
    $region20: #{tpu_custom_call.1} parent=1 // pred_region
      %56 = dma.done [#allocation3], 4096
    $region21: #{tpu_custom_call.1} parent=1 // pred_fallthru
      _
    // Predicated region
    $region22: #{tpu_custom_call.1} parent=1 // pred_check
      _
    $region23: #{tpu_custom_call.1} parent=1 // pred_check_branch
      %58 = sbr.rel (0) target = $region25
    $region24: #{tpu_custom_call.1} parent=1 // pred_region
      %60 = dma.done [#allocation6], 4096
    $region25: #{tpu_custom_call.1} parent=1 // pred_fallthru
      _
    // Predicated region
    $region26: #{tpu_custom_call.1} parent=1 // pred_check
      _
    $region27: #{tpu_custom_call.1} parent=1 // pred_check_branch
      %62 = sbr.rel (0) target = $region29
    $region28: #{tpu_custom_call.1} parent=1 // pred_region
      %64 = dma.done [#allocation6], 2048
    $region29: #{tpu_custom_call.1} parent=1 // pred_fallthru
      _
    %v65 = vld [vmem:[#allocation2] sm:$0xff]
    %v66 = vld [vmem:[#allocation2 + $0x8] sm:$0xff]
    %v67 = vld [vmem:[#allocation2 + $0x10] sm:$0xff]
    %v68 = vld [vmem:[#allocation2 + $0x18] sm:$0xff]
    %v69 = vld [vmem:[#allocation2 + $0x20] sm:$0xff]
    %v70 = vld [vmem:[#allocation2 + $0x28] sm:$0xff]
    %v71 = vld [vmem:[#allocation2 + $0x30] sm:$0xff]
    %v72 = vld [vmem:[#allocation2 + $0x38] sm:$0xff]
    %v73 = vld [vmem:[#allocation2 + $0x40] sm:$0xff]
    %v74 = vld [vmem:[#allocation2 + $0x48] sm:$0xff]
    %v75 = vld [vmem:[#allocation2 + $0x50] sm:$0xff]
    %v76 = vld [vmem:[#allocation2 + $0x58] sm:$0xff]
    %v77 = vld [vmem:[#allocation2 + $0x60] sm:$0xff]
    %v78 = vld [vmem:[#allocation2 + $0x68] sm:$0xff]
    %v79 = vld [vmem:[#allocation2 + $0x70] sm:$0xff]
    %v80 = vld [vmem:[#allocation2 + $0x78] sm:$0xff]
    %v81 = vld [vmem:[#allocation2 + $0x80] sm:$0xff]
    %v82 = vld [vmem:[#allocation2 + $0x88] sm:$0xff]
    %v83 = vld [vmem:[#allocation2 + $0x90] sm:$0xff]
    %v84 = vld [vmem:[#allocation2 + $0x98] sm:$0xff]
    %v85 = vld [vmem:[#allocation2 + $0xa0] sm:$0xff]
    %v86 = vld [vmem:[#allocation2 + $0xa8] sm:$0xff]
    %v87 = vld [vmem:[#allocation2 + $0xb0] sm:$0xff]
    %v88 = vld [vmem:[#allocation2 + $0xb8] sm:$0xff]
    %v89 = vld [vmem:[#allocation2 + $0xc0] sm:$0xff]
    %v90 = vld [vmem:[#allocation2 + $0xc8] sm:$0xff]
    %v91 = vld [vmem:[#allocation2 + $0xd0] sm:$0xff]
    %v92 = vld [vmem:[#allocation2 + $0xd8] sm:$0xff]
    %v93 = vld [vmem:[#allocation2 + $0xe0] sm:$0xff]
    %v94 = vld [vmem:[#allocation2 + $0xe8] sm:$0xff]
    %v95 = vld [vmem:[#allocation2 + $0xf0] sm:$0xff]
    %v96 = vld [vmem:[#allocation2 + $0xf8] sm:$0xff]
    %v97 = vld [vmem:[#allocation7] sm:$0xff]
    %v98 = vld [vmem:[#allocation7 + $0x8] sm:$0xff]
    %v99 = vld [vmem:[#allocation7 + $0x10] sm:$0xff]
    %v100 = vld [vmem:[#allocation7 + $0x18] sm:$0xff]
    %v101 = vld [vmem:[#allocation7 + $0x20] sm:$0xff]
    %v102 = vld [vmem:[#allocation7 + $0x28] sm:$0xff]
    %v103 = vld [vmem:[#allocation7 + $0x30] sm:$0xff]
    %v104 = vld [vmem:[#allocation7 + $0x38] sm:$0xff]
    %v105 = vld [vmem:[#allocation7 + $0x40] sm:$0xff]
    %v106 = vld [vmem:[#allocation7 + $0x48] sm:$0xff]
    %v107 = vld [vmem:[#allocation7 + $0x50] sm:$0xff]
    %v108 = vld [vmem:[#allocation7 + $0x58] sm:$0xff]
    %v109 = vld [vmem:[#allocation7 + $0x60] sm:$0xff]
    %v110 = vld [vmem:[#allocation7 + $0x68] sm:$0xff]
    %v111 = vld [vmem:[#allocation7 + $0x70] sm:$0xff]
    %v112 = vld [vmem:[#allocation7 + $0x78] sm:$0xff]
    %v113 = vld [vmem:[%s3] sm:$0x1]
    %v114 = vld [vmem:[#allocation5] sm:$0xff]
    %v115 = vld [vmem:[#allocation5 + $0x8] sm:$0xff]
    %v116 = vld [vmem:[#allocation5 + $0x10] sm:$0xff]
    %v117 = vld [vmem:[#allocation5 + $0x18] sm:$0xff]
    %v118 = vld [vmem:[#allocation5 + $0x20] sm:$0xff]
    %v119 = vld [vmem:[#allocation5 + $0x28] sm:$0xff]
    %v120 = vld [vmem:[#allocation5 + $0x30] sm:$0xff]
    %v121 = vld [vmem:[#allocation5 + $0x38] sm:$0xff]
    %v122 = vld [vmem:[#allocation5 + $0x40] sm:$0xff]
    %v123 = vld [vmem:[#allocation5 + $0x48] sm:$0xff]
    %v124 = vld [vmem:[#allocation5 + $0x50] sm:$0xff]
    %v125 = vld [vmem:[#allocation5 + $0x58] sm:$0xff]
    %v126 = vld [vmem:[#allocation5 + $0x60] sm:$0xff]
    %v127 = vld [vmem:[#allocation5 + $0x68] sm:$0xff]
    %v128 = vld [vmem:[#allocation5 + $0x70] sm:$0xff]
    %v129 = vld [vmem:[#allocation5 + $0x78] sm:$0xff]
    %v130 = vld [vmem:[#allocation5 + $0x80] sm:$0xff]
    %v131 = vld [vmem:[#allocation5 + $0x88] sm:$0xff]
    %v132 = vld [vmem:[#allocation5 + $0x90] sm:$0xff]
    %v133 = vld [vmem:[#allocation5 + $0x98] sm:$0xff]
    %v134 = vld [vmem:[#allocation5 + $0xa0] sm:$0xff]
    %v135 = vld [vmem:[#allocation5 + $0xa8] sm:$0xff]
    %v136 = vld [vmem:[#allocation5 + $0xb0] sm:$0xff]
    %v137 = vld [vmem:[#allocation5 + $0xb8] sm:$0xff]
    %v138 = vld [vmem:[#allocation5 + $0xc0] sm:$0xff]
    %v139 = vld [vmem:[#allocation5 + $0xc8] sm:$0xff]
    %v140 = vld [vmem:[#allocation5 + $0xd0] sm:$0xff]
    %v141 = vld [vmem:[#allocation5 + $0xd8] sm:$0xff]
    %v142 = vld [vmem:[#allocation5 + $0xe0] sm:$0xff]
    %v143 = vld [vmem:[#allocation5 + $0xe8] sm:$0xff]
    %v144 = vld [vmem:[#allocation5 + $0xf0] sm:$0xff]
    %v145 = vld [vmem:[#allocation5 + $0xf8] sm:$0xff]
    %v146 = vpack.c.bf16 %v115, %v114
    %v147 = vpack.c.bf16 %v117, %v116
    %v148 = vpack.c.bf16 %v119, %v118
    %v149 = vpack.c.bf16 %v121, %v120
    %v150 = vpack.c.bf16 %v123, %v122
    %v151 = vpack.c.bf16 %v125, %v124
    %v152 = vpack.c.bf16 %v127, %v126
    %v153 = vpack.c.bf16 %v129, %v128
    %v154 = vpack.c.bf16 %v131, %v130
    %v155 = vpack.c.bf16 %v133, %v132
    %v156 = vpack.c.bf16 %v135, %v134
    %v157 = vpack.c.bf16 %v137, %v136
    %v158 = vpack.c.bf16 %v139, %v138
    %v159 = vpack.c.bf16 %v141, %v140
    %v160 = vpack.c.bf16 %v143, %v142
    %v161 = vpack.c.bf16 %v145, %v144
    %v194 = vunpack.c.l.b16 %v65
    %v195 = vunpack.c.h.b16 %v65
    %v196 = vunpack.c.l.b16 %v66
    %v197 = vunpack.c.h.b16 %v66
    %v198 = vunpack.c.l.b16 %v67
    %v199 = vunpack.c.h.b16 %v67
    %v200 = vunpack.c.l.b16 %v68
    %v201 = vunpack.c.h.b16 %v68
    %v202 = vunpack.c.l.b16 %v69
    %v203 = vunpack.c.h.b16 %v69
    %v204 = vunpack.c.l.b16 %v70
    %v205 = vunpack.c.h.b16 %v70
    %v206 = vunpack.c.l.b16 %v71
    %v207 = vunpack.c.h.b16 %v71
    %v208 = vunpack.c.l.b16 %v72
    %v209 = vunpack.c.h.b16 %v72
    %v210 = vunpack.c.l.b16 %v73
    %v211 = vunpack.c.h.b16 %v73
    %v212 = vunpack.c.l.b16 %v74
    %v213 = vunpack.c.h.b16 %v74
    %v214 = vunpack.c.l.b16 %v75
    %v215 = vunpack.c.h.b16 %v75
    %v216 = vunpack.c.l.b16 %v76
    %v217 = vunpack.c.h.b16 %v76
    %v218 = vunpack.c.l.b16 %v77
    %v219 = vunpack.c.h.b16 %v77
    %v220 = vunpack.c.l.b16 %v78
    %v221 = vunpack.c.h.b16 %v78
    %v222 = vunpack.c.l.b16 %v79
    %v223 = vunpack.c.h.b16 %v79
    %v224 = vunpack.c.l.b16 %v80
    %v225 = vunpack.c.h.b16 %v80
    %v226 = vunpack.c.l.b16 %v81
    %v227 = vunpack.c.h.b16 %v81
    %v228 = vunpack.c.l.b16 %v82
    %v229 = vunpack.c.h.b16 %v82
    %v230 = vunpack.c.l.b16 %v83
    %v231 = vunpack.c.h.b16 %v83
    %v232 = vunpack.c.l.b16 %v84
    %v233 = vunpack.c.h.b16 %v84
    %v234 = vunpack.c.l.b16 %v85
    %v235 = vunpack.c.h.b16 %v85
    %v236 = vunpack.c.l.b16 %v86
    %v237 = vunpack.c.h.b16 %v86
    %v238 = vunpack.c.l.b16 %v87
    %v239 = vunpack.c.h.b16 %v87
    %v240 = vunpack.c.l.b16 %v88
    %v241 = vunpack.c.h.b16 %v88
    %v242 = vunpack.c.l.b16 %v89
    %v243 = vunpack.c.h.b16 %v89
    %v244 = vunpack.c.l.b16 %v90
    %v245 = vunpack.c.h.b16 %v90
    %v246 = vunpack.c.l.b16 %v91
    %v247 = vunpack.c.h.b16 %v91
    %v248 = vunpack.c.l.b16 %v92
    %v249 = vunpack.c.h.b16 %v92
    %v250 = vunpack.c.l.b16 %v93
    %v251 = vunpack.c.h.b16 %v93
    %v252 = vunpack.c.l.b16 %v94
    %v253 = vunpack.c.h.b16 %v94
    %v254 = vunpack.c.l.b16 %v95
    %v255 = vunpack.c.h.b16 %v95
    %v256 = vunpack.c.l.b16 %v96
    %v257 = vunpack.c.h.b16 %v96
    %v258 = vpack.c.b16 %v196, %v194
    %v259 = vpack.c.b16 %v197, %v195
    %v260 = vpack.c.b16 %v200, %v198
    %v261 = vpack.c.b16 %v201, %v199
    %v262 = vpack.c.b16 %v204, %v202
    %v263 = vpack.c.b16 %v205, %v203
    %v264 = vpack.c.b16 %v208, %v206
    %v265 = vpack.c.b16 %v209, %v207
    %v266 = vpack.c.b16 %v212, %v210
    %v267 = vpack.c.b16 %v213, %v211
    %v268 = vpack.c.b16 %v216, %v214
    %v269 = vpack.c.b16 %v217, %v215
    %v270 = vpack.c.b16 %v220, %v218
    %v271 = vpack.c.b16 %v221, %v219
    %v272 = vpack.c.b16 %v224, %v222
    %v273 = vpack.c.b16 %v225, %v223
    %v274 = vpack.c.b16 %v228, %v226
    %v275 = vpack.c.b16 %v229, %v227
    %v276 = vpack.c.b16 %v232, %v230
    %v277 = vpack.c.b16 %v233, %v231
    %v278 = vpack.c.b16 %v236, %v234
    %v279 = vpack.c.b16 %v237, %v235
    %v280 = vpack.c.b16 %v240, %v238
    %v281 = vpack.c.b16 %v241, %v239
    %v282 = vpack.c.b16 %v244, %v242
    %v283 = vpack.c.b16 %v245, %v243
    %v284 = vpack.c.b16 %v248, %v246
    %v285 = vpack.c.b16 %v249, %v247
    %v286 = vpack.c.b16 %v252, %v250
    %v287 = vpack.c.b16 %v253, %v251
    %v288 = vpack.c.b16 %v256, %v254
    %v289 = vpack.c.b16 %v257, %v255
    %322 = vmatpush.bf16.msra.mxu0 %v153
    %323 = vmatpush.bf16.msra.mxu0 %v152
    %324 = vmatpush.bf16.msra.mxu0 %v151
    %325 = vmatpush.bf16.msra.mxu0 %v150
    %326 = vmatpush.bf16.msra.mxu0 %v149
    %327 = vmatpush.bf16.msra.mxu0 %v148
    %328 = vmatpush.bf16.msra.mxu0 %v147
    %329 = vmatpush.bf16.msra.mxu0 %v146
    %330 = vmatmul.bf16.gmra.mxu0 %v258
    %v331 = vpop.f32.mrf.mxu0
    %v332 = vadd.f32 0.0, %v331
    %v333 = vpop.f32.mrf.mxu0
    %v334 = vadd.f32 0.0, %v333
    %335 = vmatmul.bf16.gmra.mxu0 %v260
    %v336 = vpop.f32.mrf.mxu0
    %v337 = vadd.f32 0.0, %v336
    %v338 = vpop.f32.mrf.mxu0
    %v339 = vadd.f32 0.0, %v338
    %340 = vmatmul.bf16.gmra.mxu0 %v262
    %v341 = vpop.f32.mrf.mxu0
    %v342 = vadd.f32 0.0, %v341
    %v343 = vpop.f32.mrf.mxu0
    %v344 = vadd.f32 0.0, %v343
    %345 = vmatmul.bf16.gmra.mxu0 %v264
    %v346 = vpop.f32.mrf.mxu0
    %v347 = vadd.f32 0.0, %v346
    %v348 = vpop.f32.mrf.mxu0
    %v349 = vadd.f32 0.0, %v348
    %350 = vmatmul.bf16.gmra.mxu0 %v266
    %v351 = vpop.f32.mrf.mxu0
    %v352 = vadd.f32 0.0, %v351
    %v353 = vpop.f32.mrf.mxu0
    %v354 = vadd.f32 0.0, %v353
    %355 = vmatmul.bf16.gmra.mxu0 %v268
    %v356 = vpop.f32.mrf.mxu0
    %v357 = vadd.f32 0.0, %v356
    %v358 = vpop.f32.mrf.mxu0
    %v359 = vadd.f32 0.0, %v358
    %360 = vmatmul.bf16.gmra.mxu0 %v270
    %v361 = vpop.f32.mrf.mxu0
    %v362 = vadd.f32 0.0, %v361
    %v363 = vpop.f32.mrf.mxu0
    %v364 = vadd.f32 0.0, %v363
    %365 = vmatmul.bf16.gmra.mxu0 %v272
    %v366 = vpop.f32.mrf.mxu0
    %v367 = vadd.f32 0.0, %v366
    %v368 = vpop.f32.mrf.mxu0
    %v369 = vadd.f32 0.0, %v368
    %370 = vmatmul.bf16.gmra.mxu0 %v274
    %v371 = vpop.f32.mrf.mxu0
    %v372 = vadd.f32 0.0, %v371
    %v373 = vpop.f32.mrf.mxu0
    %v374 = vadd.f32 0.0, %v373
    %375 = vmatmul.bf16.gmra.mxu0 %v276
    %v376 = vpop.f32.mrf.mxu0
    %v377 = vadd.f32 0.0, %v376
    %v378 = vpop.f32.mrf.mxu0
    %v379 = vadd.f32 0.0, %v378
    %380 = vmatmul.bf16.gmra.mxu0 %v278
    %v381 = vpop.f32.mrf.mxu0
    %v382 = vadd.f32 0.0, %v381
    %v383 = vpop.f32.mrf.mxu0
    %v384 = vadd.f32 0.0, %v383
    %385 = vmatmul.bf16.gmra.mxu0 %v280
    %v386 = vpop.f32.mrf.mxu0
    %v387 = vadd.f32 0.0, %v386
    %v388 = vpop.f32.mrf.mxu0
    %v389 = vadd.f32 0.0, %v388
    %390 = vmatmul.bf16.gmra.mxu0 %v282
    %v391 = vpop.f32.mrf.mxu0
    %v392 = vadd.f32 0.0, %v391
    %v393 = vpop.f32.mrf.mxu0
    %v394 = vadd.f32 0.0, %v393
    %395 = vmatmul.bf16.gmra.mxu0 %v284
    %v396 = vpop.f32.mrf.mxu0
    %v397 = vadd.f32 0.0, %v396
    %v398 = vpop.f32.mrf.mxu0
    %v399 = vadd.f32 0.0, %v398
    %400 = vmatmul.bf16.gmra.mxu0 %v286
    %v401 = vpop.f32.mrf.mxu0
    %v402 = vadd.f32 0.0, %v401
    %v403 = vpop.f32.mrf.mxu0
    %v404 = vadd.f32 0.0, %v403
    %405 = vmatmul.bf16.gmra.mxu0 %v288
    %v406 = vpop.f32.mrf.mxu0
    %v407 = vadd.f32 0.0, %v406
    %v408 = vpop.f32.mrf.mxu0
    %v409 = vadd.f32 0.0, %v408
    %410 = vdwg.mxu0
    %411 = vmatpush.bf16.msra.mxu0 %v161
    %412 = vmatpush.bf16.msra.mxu0 %v160
    %413 = vmatpush.bf16.msra.mxu0 %v159
    %414 = vmatpush.bf16.msra.mxu0 %v158
    %415 = vmatpush.bf16.msra.mxu0 %v157
    %416 = vmatpush.bf16.msra.mxu0 %v156
    %417 = vmatpush.bf16.msra.mxu0 %v155
    %418 = vmatpush.bf16.msra.mxu0 %v154
    %419 = vmatmul.bf16.gmra.mxu0 %v259
    %v420 = vpop.f32.mrf.mxu0
    %v421 = vadd.f32 %v332, %v420
    %v422 = vpop.f32.mrf.mxu0
    %v423 = vadd.f32 %v334, %v422
    %424 = vmatmul.bf16.gmra.mxu0 %v261
    %v425 = vpop.f32.mrf.mxu0
    %v426 = vadd.f32 %v337, %v425
    %v427 = vpop.f32.mrf.mxu0
    %v428 = vadd.f32 %v339, %v427
    %429 = vmatmul.bf16.gmra.mxu0 %v263
    %v430 = vpop.f32.mrf.mxu0
    %v431 = vadd.f32 %v342, %v430
    %v432 = vpop.f32.mrf.mxu0
    %v433 = vadd.f32 %v344, %v432
    %434 = vmatmul.bf16.gmra.mxu0 %v265
    %v435 = vpop.f32.mrf.mxu0
    %v436 = vadd.f32 %v347, %v435
    %v437 = vpop.f32.mrf.mxu0
    %v438 = vadd.f32 %v349, %v437
    %439 = vmatmul.bf16.gmra.mxu0 %v267
    %v440 = vpop.f32.mrf.mxu0
    %v441 = vadd.f32 %v352, %v440
    %v442 = vpop.f32.mrf.mxu0
    %v443 = vadd.f32 %v354, %v442
    %444 = vmatmul.bf16.gmra.mxu0 %v269
    %v445 = vpop.f32.mrf.mxu0
    %v446 = vadd.f32 %v357, %v445
    %v447 = vpop.f32.mrf.mxu0
    %v448 = vadd.f32 %v359, %v447
    %449 = vmatmul.bf16.gmra.mxu0 %v271
    %v450 = vpop.f32.mrf.mxu0
    %v451 = vadd.f32 %v362, %v450
    %v452 = vpop.f32.mrf.mxu0
    %v453 = vadd.f32 %v364, %v452
    %454 = vmatmul.bf16.gmra.mxu0 %v273
    %v455 = vpop.f32.mrf.mxu0
    %v456 = vadd.f32 %v367, %v455
    %v457 = vpop.f32.mrf.mxu0
    %v458 = vadd.f32 %v369, %v457
    %459 = vmatmul.bf16.gmra.mxu0 %v275
    %v460 = vpop.f32.mrf.mxu0
    %v461 = vadd.f32 %v372, %v460
    %v462 = vpop.f32.mrf.mxu0
    %v463 = vadd.f32 %v374, %v462
    %464 = vmatmul.bf16.gmra.mxu0 %v277
    %v465 = vpop.f32.mrf.mxu0
    %v466 = vadd.f32 %v377, %v465
    %v467 = vpop.f32.mrf.mxu0
    %v468 = vadd.f32 %v379, %v467
    %469 = vmatmul.bf16.gmra.mxu0 %v279
    %v470 = vpop.f32.mrf.mxu0
    %v471 = vadd.f32 %v382, %v470
    %v472 = vpop.f32.mrf.mxu0
    %v473 = vadd.f32 %v384, %v472
    %474 = vmatmul.bf16.gmra.mxu0 %v281
    %v475 = vpop.f32.mrf.mxu0
    %v476 = vadd.f32 %v387, %v475
    %v477 = vpop.f32.mrf.mxu0
    %v478 = vadd.f32 %v389, %v477
    %479 = vmatmul.bf16.gmra.mxu0 %v283
    %v480 = vpop.f32.mrf.mxu0
    %v481 = vadd.f32 %v392, %v480
    %v482 = vpop.f32.mrf.mxu0
    %v483 = vadd.f32 %v394, %v482
    %484 = vmatmul.bf16.gmra.mxu0 %v285
    %v485 = vpop.f32.mrf.mxu0
    %v486 = vadd.f32 %v397, %v485
    %v487 = vpop.f32.mrf.mxu0
    %v488 = vadd.f32 %v399, %v487
    %489 = vmatmul.bf16.gmra.mxu0 %v287
    %v490 = vpop.f32.mrf.mxu0
    %v491 = vadd.f32 %v402, %v490
    %v492 = vpop.f32.mrf.mxu0
    %v493 = vadd.f32 %v404, %v492
    %494 = vmatmul.bf16.gmra.mxu0 %v289
    %v495 = vpop.f32.mrf.mxu0
    %v496 = vadd.f32 %v407, %v495
    %v497 = vpop.f32.mrf.mxu0
    %v498 = vadd.f32 %v409, %v497
    %499 = vdwg.mxu0
    %v501 = vperm.slane %v113, 0
    %503 = vmatpush.msra.mxu0 %v112
    %504 = vmatpush.msra.mxu0 %v111
    %505 = vmatpush.msra.mxu0 %v110
    %506 = vmatpush.msra.mxu0 %v109
    %507 = vmatpush.msra.mxu0 %v108
    %508 = vmatpush.msra.mxu0 %v107
    %509 = vmatpush.msra.mxu0 %v106
    %510 = vmatpush.msra.mxu0 %v105
    %511 = vmatpush.msra.mxu0 %v104
    %512 = vmatpush.msra.mxu0 %v103
    %513 = vmatpush.msra.mxu0 %v102
    %514 = vmatpush.msra.mxu0 %v101
    %515 = vmatpush.msra.mxu0 %v100
    %516 = vmatpush.msra.mxu0 %v99
    %517 = vmatpush.msra.mxu0 %v98
    %518 = vmatpush.msra.mxu0 %v97
    %519 = vmatmul.f32.gmra.mxu0 %v421
    %v520 = vpop.f32.mrf.mxu0
    %v521 = vadd.f32 %v501, %v520
    %522 = vmatmul.f32.gmra.mxu0 %v423
    %v523 = vpop.f32.mrf.mxu0
    %v524 = vadd.f32 %v501, %v523
    %525 = vmatmul.f32.gmra.mxu0 %v426
    %v526 = vpop.f32.mrf.mxu0
    %v527 = vadd.f32 %v501, %v526
    %528 = vmatmul.f32.gmra.mxu0 %v428
    %v529 = vpop.f32.mrf.mxu0
    %v530 = vadd.f32 %v501, %v529
    %531 = vmatmul.f32.gmra.mxu0 %v431
    %v532 = vpop.f32.mrf.mxu0
    %v533 = vadd.f32 %v501, %v532
    %534 = vmatmul.f32.gmra.mxu0 %v433
    %v535 = vpop.f32.mrf.mxu0
    %v536 = vadd.f32 %v501, %v535
    %537 = vmatmul.f32.gmra.mxu0 %v436
    %v538 = vpop.f32.mrf.mxu0
    %v539 = vadd.f32 %v501, %v538
    %540 = vmatmul.f32.gmra.mxu0 %v438
    %v541 = vpop.f32.mrf.mxu0
    %v542 = vadd.f32 %v501, %v541
    %543 = vmatmul.f32.gmra.mxu0 %v441
    %v544 = vpop.f32.mrf.mxu0
    %v545 = vadd.f32 %v501, %v544
    %546 = vmatmul.f32.gmra.mxu0 %v443
    %v547 = vpop.f32.mrf.mxu0
    %v548 = vadd.f32 %v501, %v547
    %549 = vmatmul.f32.gmra.mxu0 %v446
    %v550 = vpop.f32.mrf.mxu0
    %v551 = vadd.f32 %v501, %v550
    %552 = vmatmul.f32.gmra.mxu0 %v448
    %v553 = vpop.f32.mrf.mxu0
    %v554 = vadd.f32 %v501, %v553
    %555 = vmatmul.f32.gmra.mxu0 %v451
    %v556 = vpop.f32.mrf.mxu0
    %v557 = vadd.f32 %v501, %v556
    %558 = vmatmul.f32.gmra.mxu0 %v453
    %v559 = vpop.f32.mrf.mxu0
    %v560 = vadd.f32 %v501, %v559
    %561 = vmatmul.f32.gmra.mxu0 %v456
    %v562 = vpop.f32.mrf.mxu0
    %v563 = vadd.f32 %v501, %v562
    %564 = vmatmul.f32.gmra.mxu0 %v458
    %v565 = vpop.f32.mrf.mxu0
    %v566 = vadd.f32 %v501, %v565
    %567 = vmatmul.f32.gmra.mxu0 %v461
    %v568 = vpop.f32.mrf.mxu0
    %v569 = vadd.f32 %v501, %v568
    %570 = vmatmul.f32.gmra.mxu0 %v463
    %v571 = vpop.f32.mrf.mxu0
    %v572 = vadd.f32 %v501, %v571
    %573 = vmatmul.f32.gmra.mxu0 %v466
    %v574 = vpop.f32.mrf.mxu0
    %v575 = vadd.f32 %v501, %v574
    %576 = vmatmul.f32.gmra.mxu0 %v468
    %v577 = vpop.f32.mrf.mxu0
    %v578 = vadd.f32 %v501, %v577
    %579 = vmatmul.f32.gmra.mxu0 %v471
    %v580 = vpop.f32.mrf.mxu0
    %v581 = vadd.f32 %v501, %v580
    %582 = vmatmul.f32.gmra.mxu0 %v473
    %v583 = vpop.f32.mrf.mxu0
    %v584 = vadd.f32 %v501, %v583
    %585 = vmatmul.f32.gmra.mxu0 %v476
    %v586 = vpop.f32.mrf.mxu0
    %v587 = vadd.f32 %v501, %v586
    %588 = vmatmul.f32.gmra.mxu0 %v478
    %v589 = vpop.f32.mrf.mxu0
    %v590 = vadd.f32 %v501, %v589
    %591 = vmatmul.f32.gmra.mxu0 %v481
    %v592 = vpop.f32.mrf.mxu0
    %v593 = vadd.f32 %v501, %v592
    %594 = vmatmul.f32.gmra.mxu0 %v483
    %v595 = vpop.f32.mrf.mxu0
    %v596 = vadd.f32 %v501, %v595
    %597 = vmatmul.f32.gmra.mxu0 %v486
    %v598 = vpop.f32.mrf.mxu0
    %v599 = vadd.f32 %v501, %v598
    %600 = vmatmul.f32.gmra.mxu0 %v488
    %v601 = vpop.f32.mrf.mxu0
    %v602 = vadd.f32 %v501, %v601
    %603 = vmatmul.f32.gmra.mxu0 %v491
    %v604 = vpop.f32.mrf.mxu0
    %v605 = vadd.f32 %v501, %v604
    %606 = vmatmul.f32.gmra.mxu0 %v493
    %v607 = vpop.f32.mrf.mxu0
    %v608 = vadd.f32 %v501, %v607
    %609 = vmatmul.f32.gmra.mxu0 %v496
    %v610 = vpop.f32.mrf.mxu0
    %v611 = vadd.f32 %v501, %v610
    %612 = vmatmul.f32.gmra.mxu0 %v498
    %v613 = vpop.f32.mrf.mxu0
    %v614 = vadd.f32 %v501, %v613
    %615 = vdwg.mxu0
    %v616 = vmax.f32 %v521, 0.0
    %v617 = vmax.f32 %v524, 0.0
    %v618 = vmax.f32 %v527, 0.0
    %v619 = vmax.f32 %v530, 0.0
    %v620 = vmax.f32 %v533, 0.0
    %v621 = vmax.f32 %v536, 0.0
    %v622 = vmax.f32 %v539, 0.0
    %v623 = vmax.f32 %v542, 0.0
    %v624 = vmax.f32 %v545, 0.0
    %v625 = vmax.f32 %v548, 0.0
    %v626 = vmax.f32 %v551, 0.0
    %v627 = vmax.f32 %v554, 0.0
    %v628 = vmax.f32 %v557, 0.0
    %v629 = vmax.f32 %v560, 0.0
    %v630 = vmax.f32 %v563, 0.0
    %v631 = vmax.f32 %v566, 0.0
    %v632 = vmax.f32 %v569, 0.0
    %v633 = vmax.f32 %v572, 0.0
    %v634 = vmax.f32 %v575, 0.0
    %v635 = vmax.f32 %v578, 0.0
    %v636 = vmax.f32 %v581, 0.0
    %v637 = vmax.f32 %v584, 0.0
    %v638 = vmax.f32 %v587, 0.0
    %v639 = vmax.f32 %v590, 0.0
    %v640 = vmax.f32 %v593, 0.0
    %v641 = vmax.f32 %v596, 0.0
    %v642 = vmax.f32 %v599, 0.0
    %v643 = vmax.f32 %v602, 0.0
    %v644 = vmax.f32 %v605, 0.0
    %v645 = vmax.f32 %v608, 0.0
    %v646 = vmax.f32 %v611, 0.0
    %v647 = vmax.f32 %v614, 0.0
    %v648 = vpack.c.bf16 %v617, %v616
    %v649 = vpack.c.bf16 %v619, %v618
    %v650 = vpack.c.bf16 %v621, %v620
    %v651 = vpack.c.bf16 %v623, %v622
    %v652 = vpack.c.bf16 %v625, %v624
    %v653 = vpack.c.bf16 %v627, %v626
    %v654 = vpack.c.bf16 %v629, %v628
    %v655 = vpack.c.bf16 %v631, %v630
    %v656 = vpack.c.bf16 %v633, %v632
    %v657 = vpack.c.bf16 %v635, %v634
    %v658 = vpack.c.bf16 %v637, %v636
    %v659 = vpack.c.bf16 %v639, %v638
    %v660 = vpack.c.bf16 %v641, %v640
    %v661 = vpack.c.bf16 %v643, %v642
    %v662 = vpack.c.bf16 %v645, %v644
    %v663 = vpack.c.bf16 %v647, %v646
    %664 = vmatpush.bf16.msra.mxu0 %v655
    %665 = vmatpush.bf16.msra.mxu0 %v654
    %666 = vmatpush.bf16.msra.mxu0 %v653
    %667 = vmatpush.bf16.msra.mxu0 %v652
    %668 = vmatpush.bf16.msra.mxu0 %v651
    %669 = vmatpush.bf16.msra.mxu0 %v650
    %670 = vmatpush.bf16.msra.mxu0 %v649
    %671 = vmatpush.bf16.msra.mxu0 %v648
    %672 = vmatmul.bf16.gmra.mxu0 %v258
    %v673 = vpop.f32.mrf.mxu0
    %v674 = vadd.f32 0.0, %v673
    %v675 = vpop.f32.mrf.mxu0
    %v676 = vadd.f32 0.0, %v675
    %677 = vmatmul.bf16.gmra.mxu0 %v260
    %v678 = vpop.f32.mrf.mxu0
    %v679 = vadd.f32 0.0, %v678
    %v680 = vpop.f32.mrf.mxu0
    %v681 = vadd.f32 0.0, %v680
    %682 = vmatmul.bf16.gmra.mxu0 %v262
    %v683 = vpop.f32.mrf.mxu0
    %v684 = vadd.f32 0.0, %v683
    %v685 = vpop.f32.mrf.mxu0
    %v686 = vadd.f32 0.0, %v685
    %687 = vmatmul.bf16.gmra.mxu0 %v264
    %v688 = vpop.f32.mrf.mxu0
    %v689 = vadd.f32 0.0, %v688
    %v690 = vpop.f32.mrf.mxu0
    %v691 = vadd.f32 0.0, %v690
    %692 = vmatmul.bf16.gmra.mxu0 %v266
    %v693 = vpop.f32.mrf.mxu0
    %v694 = vadd.f32 0.0, %v693
    %v695 = vpop.f32.mrf.mxu0
    %v696 = vadd.f32 0.0, %v695
    %697 = vmatmul.bf16.gmra.mxu0 %v268
    %v698 = vpop.f32.mrf.mxu0
    %v699 = vadd.f32 0.0, %v698
    %v700 = vpop.f32.mrf.mxu0
    %v701 = vadd.f32 0.0, %v700
    %702 = vmatmul.bf16.gmra.mxu0 %v270
    %v703 = vpop.f32.mrf.mxu0
    %v704 = vadd.f32 0.0, %v703
    %v705 = vpop.f32.mrf.mxu0
    %v706 = vadd.f32 0.0, %v705
    %707 = vmatmul.bf16.gmra.mxu0 %v272
    %v708 = vpop.f32.mrf.mxu0
    %v709 = vadd.f32 0.0, %v708
    %v710 = vpop.f32.mrf.mxu0
    %v711 = vadd.f32 0.0, %v710
    %712 = vmatmul.bf16.gmra.mxu0 %v274
    %v713 = vpop.f32.mrf.mxu0
    %v714 = vadd.f32 0.0, %v713
    %v715 = vpop.f32.mrf.mxu0
    %v716 = vadd.f32 0.0, %v715
    %717 = vmatmul.bf16.gmra.mxu0 %v276
    %v718 = vpop.f32.mrf.mxu0
    %v719 = vadd.f32 0.0, %v718
    %v720 = vpop.f32.mrf.mxu0
    %v721 = vadd.f32 0.0, %v720
    %722 = vmatmul.bf16.gmra.mxu0 %v278
    %v723 = vpop.f32.mrf.mxu0
    %v724 = vadd.f32 0.0, %v723
    %v725 = vpop.f32.mrf.mxu0
    %v726 = vadd.f32 0.0, %v725
    %727 = vmatmul.bf16.gmra.mxu0 %v280
    %v728 = vpop.f32.mrf.mxu0
    %v729 = vadd.f32 0.0, %v728
    %v730 = vpop.f32.mrf.mxu0
    %v731 = vadd.f32 0.0, %v730
    %732 = vmatmul.bf16.gmra.mxu0 %v282
    %v733 = vpop.f32.mrf.mxu0
    %v734 = vadd.f32 0.0, %v733
    %v735 = vpop.f32.mrf.mxu0
    %v736 = vadd.f32 0.0, %v735
    %737 = vmatmul.bf16.gmra.mxu0 %v284
    %v738 = vpop.f32.mrf.mxu0
    %v739 = vadd.f32 0.0, %v738
    %v740 = vpop.f32.mrf.mxu0
    %v741 = vadd.f32 0.0, %v740
    %742 = vmatmul.bf16.gmra.mxu0 %v286
    %v743 = vpop.f32.mrf.mxu0
    %v744 = vadd.f32 0.0, %v743
    %v745 = vpop.f32.mrf.mxu0
    %v746 = vadd.f32 0.0, %v745
    %747 = vmatmul.bf16.gmra.mxu0 %v288
    %v748 = vpop.f32.mrf.mxu0
    %v749 = vadd.f32 0.0, %v748
    %v750 = vpop.f32.mrf.mxu0
    %v751 = vadd.f32 0.0, %v750
    %752 = vdwg.mxu0
    %753 = vmatpush.bf16.msra.mxu0 %v663
    %754 = vmatpush.bf16.msra.mxu0 %v662
    %755 = vmatpush.bf16.msra.mxu0 %v661
    %756 = vmatpush.bf16.msra.mxu0 %v660
    %757 = vmatpush.bf16.msra.mxu0 %v659
    %758 = vmatpush.bf16.msra.mxu0 %v658
    %759 = vmatpush.bf16.msra.mxu0 %v657
    %760 = vmatpush.bf16.msra.mxu0 %v656
    %761 = vmatmul.bf16.gmra.mxu0 %v259
    %v762 = vpop.f32.mrf.mxu0
    %v763 = vadd.f32 %v674, %v762
    %v764 = vpop.f32.mrf.mxu0
    %v765 = vadd.f32 %v676, %v764
    %766 = vmatmul.bf16.gmra.mxu0 %v261
    %v767 = vpop.f32.mrf.mxu0
    %v768 = vadd.f32 %v679, %v767
    %v769 = vpop.f32.mrf.mxu0
    %v770 = vadd.f32 %v681, %v769
    %771 = vmatmul.bf16.gmra.mxu0 %v263
    %v772 = vpop.f32.mrf.mxu0
    %v773 = vadd.f32 %v684, %v772
    %v774 = vpop.f32.mrf.mxu0
    %v775 = vadd.f32 %v686, %v774
    %776 = vmatmul.bf16.gmra.mxu0 %v265
    %v777 = vpop.f32.mrf.mxu0
    %v778 = vadd.f32 %v689, %v777
    %v779 = vpop.f32.mrf.mxu0
    %v780 = vadd.f32 %v691, %v779
    %781 = vmatmul.bf16.gmra.mxu0 %v267
    %v782 = vpop.f32.mrf.mxu0
    %v783 = vadd.f32 %v694, %v782
    %v784 = vpop.f32.mrf.mxu0
    %v785 = vadd.f32 %v696, %v784
    %786 = vmatmul.bf16.gmra.mxu0 %v269
    %v787 = vpop.f32.mrf.mxu0
    %v788 = vadd.f32 %v699, %v787
    %v789 = vpop.f32.mrf.mxu0
    %v790 = vadd.f32 %v701, %v789
    %791 = vmatmul.bf16.gmra.mxu0 %v271
    %v792 = vpop.f32.mrf.mxu0
    %v793 = vadd.f32 %v704, %v792
    %v794 = vpop.f32.mrf.mxu0
    %v795 = vadd.f32 %v706, %v794
    %796 = vmatmul.bf16.gmra.mxu0 %v273
    %v797 = vpop.f32.mrf.mxu0
    %v798 = vadd.f32 %v709, %v797
    %v799 = vpop.f32.mrf.mxu0
    %v800 = vadd.f32 %v711, %v799
    %801 = vmatmul.bf16.gmra.mxu0 %v275
    %v802 = vpop.f32.mrf.mxu0
    %v803 = vadd.f32 %v714, %v802
    %v804 = vpop.f32.mrf.mxu0
    %v805 = vadd.f32 %v716, %v804
    %806 = vmatmul.bf16.gmra.mxu0 %v277
    %v807 = vpop.f32.mrf.mxu0
    %v808 = vadd.f32 %v719, %v807
    %v809 = vpop.f32.mrf.mxu0
    %v810 = vadd.f32 %v721, %v809
    %811 = vmatmul.bf16.gmra.mxu0 %v279
    %v812 = vpop.f32.mrf.mxu0
    %v813 = vadd.f32 %v724, %v812
    %v814 = vpop.f32.mrf.mxu0
    %v815 = vadd.f32 %v726, %v814
    %816 = vmatmul.bf16.gmra.mxu0 %v281
    %v817 = vpop.f32.mrf.mxu0
    %v818 = vadd.f32 %v729, %v817
    %v819 = vpop.f32.mrf.mxu0
    %v820 = vadd.f32 %v731, %v819
    %821 = vmatmul.bf16.gmra.mxu0 %v283
    %v822 = vpop.f32.mrf.mxu0
    %v823 = vadd.f32 %v734, %v822
    %v824 = vpop.f32.mrf.mxu0
    %v825 = vadd.f32 %v736, %v824
    %826 = vmatmul.bf16.gmra.mxu0 %v285
    %v827 = vpop.f32.mrf.mxu0
    %v828 = vadd.f32 %v739, %v827
    %v829 = vpop.f32.mrf.mxu0
    %v830 = vadd.f32 %v741, %v829
    %831 = vmatmul.bf16.gmra.mxu0 %v287
    %v832 = vpop.f32.mrf.mxu0
    %v833 = vadd.f32 %v744, %v832
    %v834 = vpop.f32.mrf.mxu0
    %v835 = vadd.f32 %v746, %v834
    %836 = vmatmul.bf16.gmra.mxu0 %v289
    %v837 = vpop.f32.mrf.mxu0
    %v838 = vadd.f32 %v749, %v837
    %v839 = vpop.f32.mrf.mxu0
    %v840 = vadd.f32 %v751, %v839
    %841 = vdwg.mxu0
    %842 = vmatpush.msra.mxu0 %v112
    %843 = vmatpush.msra.mxu0 %v111
    %844 = vmatpush.msra.mxu0 %v110
    %845 = vmatpush.msra.mxu0 %v109
    %846 = vmatpush.msra.mxu0 %v108
    %847 = vmatpush.msra.mxu0 %v107
    %848 = vmatpush.msra.mxu0 %v106
    %849 = vmatpush.msra.mxu0 %v105
    %850 = vmatpush.msra.mxu0 %v104
    %851 = vmatpush.msra.mxu0 %v103
    %852 = vmatpush.msra.mxu0 %v102
    %853 = vmatpush.msra.mxu0 %v101
    %854 = vmatpush.msra.mxu0 %v100
    %855 = vmatpush.msra.mxu0 %v99
    %856 = vmatpush.msra.mxu0 %v98
    %857 = vmatpush.msra.mxu0 %v97
    %858 = vmatmul.f32.gmra.mxu0 %v763
    %v859 = vpop.f32.mrf.mxu0
    %v860 = vadd.f32 %v501, %v859
    %861 = vmatmul.f32.gmra.mxu0 %v765
    %v862 = vpop.f32.mrf.mxu0
    %v863 = vadd.f32 %v501, %v862
    %864 = vmatmul.f32.gmra.mxu0 %v768
    %v865 = vpop.f32.mrf.mxu0
    %v866 = vadd.f32 %v501, %v865
    %867 = vmatmul.f32.gmra.mxu0 %v770
    %v868 = vpop.f32.mrf.mxu0
    %v869 = vadd.f32 %v501, %v868
    %870 = vmatmul.f32.gmra.mxu0 %v773
    %v871 = vpop.f32.mrf.mxu0
    %v872 = vadd.f32 %v501, %v871
    %873 = vmatmul.f32.gmra.mxu0 %v775
    %v874 = vpop.f32.mrf.mxu0
    %v875 = vadd.f32 %v501, %v874
    %876 = vmatmul.f32.gmra.mxu0 %v778
    %v877 = vpop.f32.mrf.mxu0
    %v878 = vadd.f32 %v501, %v877
    %879 = vmatmul.f32.gmra.mxu0 %v780
    %v880 = vpop.f32.mrf.mxu0
    %v881 = vadd.f32 %v501, %v880
    %882 = vmatmul.f32.gmra.mxu0 %v783
    %v883 = vpop.f32.mrf.mxu0
    %v884 = vadd.f32 %v501, %v883
    %885 = vmatmul.f32.gmra.mxu0 %v785
    %v886 = vpop.f32.mrf.mxu0
    %v887 = vadd.f32 %v501, %v886
    %888 = vmatmul.f32.gmra.mxu0 %v788
    %v889 = vpop.f32.mrf.mxu0
    %v890 = vadd.f32 %v501, %v889
    %891 = vmatmul.f32.gmra.mxu0 %v790
    %v892 = vpop.f32.mrf.mxu0
    %v893 = vadd.f32 %v501, %v892
    %894 = vmatmul.f32.gmra.mxu0 %v793
    %v895 = vpop.f32.mrf.mxu0
    %v896 = vadd.f32 %v501, %v895
    %897 = vmatmul.f32.gmra.mxu0 %v795
    %v898 = vpop.f32.mrf.mxu0
    %v899 = vadd.f32 %v501, %v898
    %900 = vmatmul.f32.gmra.mxu0 %v798
    %v901 = vpop.f32.mrf.mxu0
    %v902 = vadd.f32 %v501, %v901
    %903 = vmatmul.f32.gmra.mxu0 %v800
    %v904 = vpop.f32.mrf.mxu0
    %v905 = vadd.f32 %v501, %v904
    %906 = vmatmul.f32.gmra.mxu0 %v803
    %v907 = vpop.f32.mrf.mxu0
    %v908 = vadd.f32 %v501, %v907
    %909 = vmatmul.f32.gmra.mxu0 %v805
    %v910 = vpop.f32.mrf.mxu0
    %v911 = vadd.f32 %v501, %v910
    %912 = vmatmul.f32.gmra.mxu0 %v808
    %v913 = vpop.f32.mrf.mxu0
    %v914 = vadd.f32 %v501, %v913
    %915 = vmatmul.f32.gmra.mxu0 %v810
    %v916 = vpop.f32.mrf.mxu0
    %v917 = vadd.f32 %v501, %v916
    %918 = vmatmul.f32.gmra.mxu0 %v813
    %v919 = vpop.f32.mrf.mxu0
    %v920 = vadd.f32 %v501, %v919
    %921 = vmatmul.f32.gmra.mxu0 %v815
    %v922 = vpop.f32.mrf.mxu0
    %v923 = vadd.f32 %v501, %v922
    %924 = vmatmul.f32.gmra.mxu0 %v818
    %v925 = vpop.f32.mrf.mxu0
    %v926 = vadd.f32 %v501, %v925
    %927 = vmatmul.f32.gmra.mxu0 %v820
    %v928 = vpop.f32.mrf.mxu0
    %v929 = vadd.f32 %v501, %v928
    %930 = vmatmul.f32.gmra.mxu0 %v823
    %v931 = vpop.f32.mrf.mxu0
    %v932 = vadd.f32 %v501, %v931
    %933 = vmatmul.f32.gmra.mxu0 %v825
    %v934 = vpop.f32.mrf.mxu0
    %v935 = vadd.f32 %v501, %v934
    %936 = vmatmul.f32.gmra.mxu0 %v828
    %v937 = vpop.f32.mrf.mxu0
    %v938 = vadd.f32 %v501, %v937
    %939 = vmatmul.f32.gmra.mxu0 %v830
    %v940 = vpop.f32.mrf.mxu0
    %v941 = vadd.f32 %v501, %v940
    %942 = vmatmul.f32.gmra.mxu0 %v833
    %v943 = vpop.f32.mrf.mxu0
    %v944 = vadd.f32 %v501, %v943
    %945 = vmatmul.f32.gmra.mxu0 %v835
    %v946 = vpop.f32.mrf.mxu0
    %v947 = vadd.f32 %v501, %v946
    %948 = vmatmul.f32.gmra.mxu0 %v838
    %v949 = vpop.f32.mrf.mxu0
    %v950 = vadd.f32 %v501, %v949
    %951 = vmatmul.f32.gmra.mxu0 %v840
    %v952 = vpop.f32.mrf.mxu0
    %v953 = vadd.f32 %v501, %v952
    %954 = vdwg.mxu0
    %v955 = vmax.f32 %v860, 0.0
    %v956 = vmax.f32 %v863, 0.0
    %v957 = vmax.f32 %v866, 0.0
    %v958 = vmax.f32 %v869, 0.0
    %v959 = vmax.f32 %v872, 0.0
    %v960 = vmax.f32 %v875, 0.0
    %v961 = vmax.f32 %v878, 0.0
    %v962 = vmax.f32 %v881, 0.0
    %v963 = vmax.f32 %v884, 0.0
    %v964 = vmax.f32 %v887, 0.0
    %v965 = vmax.f32 %v890, 0.0
    %v966 = vmax.f32 %v893, 0.0
    %v967 = vmax.f32 %v896, 0.0
    %v968 = vmax.f32 %v899, 0.0
    %v969 = vmax.f32 %v902, 0.0
    %v970 = vmax.f32 %v905, 0.0
    %v971 = vmax.f32 %v908, 0.0
    %v972 = vmax.f32 %v911, 0.0
    %v973 = vmax.f32 %v914, 0.0
    %v974 = vmax.f32 %v917, 0.0
    %v975 = vmax.f32 %v920, 0.0
    %v976 = vmax.f32 %v923, 0.0
    %v977 = vmax.f32 %v926, 0.0
    %v978 = vmax.f32 %v929, 0.0
    %v979 = vmax.f32 %v932, 0.0
    %v980 = vmax.f32 %v935, 0.0
    %v981 = vmax.f32 %v938, 0.0
    %v982 = vmax.f32 %v941, 0.0
    %v983 = vmax.f32 %v944, 0.0
    %v984 = vmax.f32 %v947, 0.0
    %v985 = vmax.f32 %v950, 0.0
    %v986 = vmax.f32 %v953, 0.0
    %v987 = vpack.c.bf16 %v956, %v955
    %v988 = vpack.c.bf16 %v958, %v957
    %v989 = vpack.c.bf16 %v960, %v959
    %v990 = vpack.c.bf16 %v962, %v961
    %v991 = vpack.c.bf16 %v964, %v963
    %v992 = vpack.c.bf16 %v966, %v965
    %v993 = vpack.c.bf16 %v968, %v967
    %v994 = vpack.c.bf16 %v970, %v969
    %v995 = vpack.c.bf16 %v972, %v971
    %v996 = vpack.c.bf16 %v974, %v973
    %v997 = vpack.c.bf16 %v976, %v975
    %v998 = vpack.c.bf16 %v978, %v977
    %v999 = vpack.c.bf16 %v980, %v979
    %v1000 = vpack.c.bf16 %v982, %v981
    %v1001 = vpack.c.bf16 %v984, %v983
    %v1002 = vpack.c.bf16 %v986, %v985
    %1003 = vmatpush.bf16.msra.mxu0 %v994
    %1004 = vmatpush.bf16.msra.mxu0 %v993
    %1005 = vmatpush.bf16.msra.mxu0 %v992
    %1006 = vmatpush.bf16.msra.mxu0 %v991
    %1007 = vmatpush.bf16.msra.mxu0 %v990
    %1008 = vmatpush.bf16.msra.mxu0 %v989
    %1009 = vmatpush.bf16.msra.mxu0 %v988
    %1010 = vmatpush.bf16.msra.mxu0 %v987
    %1011 = vmatmul.bf16.gmra.mxu0 %v258
    %v1012 = vpop.f32.mrf.mxu0
    %v1013 = vadd.f32 0.0, %v1012
    %v1014 = vpop.f32.mrf.mxu0
    %v1015 = vadd.f32 0.0, %v1014
    %1016 = vmatmul.bf16.gmra.mxu0 %v260
    %v1017 = vpop.f32.mrf.mxu0
    %v1018 = vadd.f32 0.0, %v1017
    %v1019 = vpop.f32.mrf.mxu0
    %v1020 = vadd.f32 0.0, %v1019
    %1021 = vmatmul.bf16.gmra.mxu0 %v262
    %v1022 = vpop.f32.mrf.mxu0
    %v1023 = vadd.f32 0.0, %v1022
    %v1024 = vpop.f32.mrf.mxu0
    %v1025 = vadd.f32 0.0, %v1024
    %1026 = vmatmul.bf16.gmra.mxu0 %v264
    %v1027 = vpop.f32.mrf.mxu0
    %v1028 = vadd.f32 0.0, %v1027
    %v1029 = vpop.f32.mrf.mxu0
    %v1030 = vadd.f32 0.0, %v1029
    %1031 = vmatmul.bf16.gmra.mxu0 %v266
    %v1032 = vpop.f32.mrf.mxu0
    %v1033 = vadd.f32 0.0, %v1032
    %v1034 = vpop.f32.mrf.mxu0
    %v1035 = vadd.f32 0.0, %v1034
    %1036 = vmatmul.bf16.gmra.mxu0 %v268
    %v1037 = vpop.f32.mrf.mxu0
    %v1038 = vadd.f32 0.0, %v1037
    %v1039 = vpop.f32.mrf.mxu0
    %v1040 = vadd.f32 0.0, %v1039
    %1041 = vmatmul.bf16.gmra.mxu0 %v270
    %v1042 = vpop.f32.mrf.mxu0
    %v1043 = vadd.f32 0.0, %v1042
    %v1044 = vpop.f32.mrf.mxu0
    %v1045 = vadd.f32 0.0, %v1044
    %1046 = vmatmul.bf16.gmra.mxu0 %v272
    %v1047 = vpop.f32.mrf.mxu0
    %v1048 = vadd.f32 0.0, %v1047
    %v1049 = vpop.f32.mrf.mxu0
    %v1050 = vadd.f32 0.0, %v1049
    %1051 = vmatmul.bf16.gmra.mxu0 %v274
    %v1052 = vpop.f32.mrf.mxu0
    %v1053 = vadd.f32 0.0, %v1052
    %v1054 = vpop.f32.mrf.mxu0
    %v1055 = vadd.f32 0.0, %v1054
    %1056 = vmatmul.bf16.gmra.mxu0 %v276
    %v1057 = vpop.f32.mrf.mxu0
    %v1058 = vadd.f32 0.0, %v1057
    %v1059 = vpop.f32.mrf.mxu0
    %v1060 = vadd.f32 0.0, %v1059
    %1061 = vmatmul.bf16.gmra.mxu0 %v278
    %v1062 = vpop.f32.mrf.mxu0
    %v1063 = vadd.f32 0.0, %v1062
    %v1064 = vpop.f32.mrf.mxu0
    %v1065 = vadd.f32 0.0, %v1064
    %1066 = vmatmul.bf16.gmra.mxu0 %v280
    %v1067 = vpop.f32.mrf.mxu0
    %v1068 = vadd.f32 0.0, %v1067
    %v1069 = vpop.f32.mrf.mxu0
    %v1070 = vadd.f32 0.0, %v1069
    %1071 = vmatmul.bf16.gmra.mxu0 %v282
    %v1072 = vpop.f32.mrf.mxu0
    %v1073 = vadd.f32 0.0, %v1072
    %v1074 = vpop.f32.mrf.mxu0
    %v1075 = vadd.f32 0.0, %v1074
    %1076 = vmatmul.bf16.gmra.mxu0 %v284
    %v1077 = vpop.f32.mrf.mxu0
    %v1078 = vadd.f32 0.0, %v1077
    %v1079 = vpop.f32.mrf.mxu0
    %v1080 = vadd.f32 0.0, %v1079
    %1081 = vmatmul.bf16.gmra.mxu0 %v286
    %v1082 = vpop.f32.mrf.mxu0
    %v1083 = vadd.f32 0.0, %v1082
    %v1084 = vpop.f32.mrf.mxu0
    %v1085 = vadd.f32 0.0, %v1084
    %1086 = vmatmul.bf16.gmra.mxu0 %v288
    %v1087 = vpop.f32.mrf.mxu0
    %v1088 = vadd.f32 0.0, %v1087
    %v1089 = vpop.f32.mrf.mxu0
    %v1090 = vadd.f32 0.0, %v1089
    %1091 = vdwg.mxu0
    %1092 = vmatpush.bf16.msra.mxu0 %v1002
    %1093 = vmatpush.bf16.msra.mxu0 %v1001
    %1094 = vmatpush.bf16.msra.mxu0 %v1000
    %1095 = vmatpush.bf16.msra.mxu0 %v999
    %1096 = vmatpush.bf16.msra.mxu0 %v998
    %1097 = vmatpush.bf16.msra.mxu0 %v997
    %1098 = vmatpush.bf16.msra.mxu0 %v996
    %1099 = vmatpush.bf16.msra.mxu0 %v995
    %1100 = vmatmul.bf16.gmra.mxu0 %v259
    %v1101 = vpop.f32.mrf.mxu0
    %v1102 = vadd.f32 %v1013, %v1101
    %v1103 = vpop.f32.mrf.mxu0
    %v1104 = vadd.f32 %v1015, %v1103
    %1105 = vmatmul.bf16.gmra.mxu0 %v261
    %v1106 = vpop.f32.mrf.mxu0
    %v1107 = vadd.f32 %v1018, %v1106
    %v1108 = vpop.f32.mrf.mxu0
    %v1109 = vadd.f32 %v1020, %v1108
    %1110 = vmatmul.bf16.gmra.mxu0 %v263
    %v1111 = vpop.f32.mrf.mxu0
    %v1112 = vadd.f32 %v1023, %v1111
    %v1113 = vpop.f32.mrf.mxu0
    %v1114 = vadd.f32 %v1025, %v1113
    %1115 = vmatmul.bf16.gmra.mxu0 %v265
    %v1116 = vpop.f32.mrf.mxu0
    %v1117 = vadd.f32 %v1028, %v1116
    %v1118 = vpop.f32.mrf.mxu0
    %v1119 = vadd.f32 %v1030, %v1118
    %1120 = vmatmul.bf16.gmra.mxu0 %v267
    %v1121 = vpop.f32.mrf.mxu0
    %v1122 = vadd.f32 %v1033, %v1121
    %v1123 = vpop.f32.mrf.mxu0
    %v1124 = vadd.f32 %v1035, %v1123
    %1125 = vmatmul.bf16.gmra.mxu0 %v269
    %v1126 = vpop.f32.mrf.mxu0
    %v1127 = vadd.f32 %v1038, %v1126
    %v1128 = vpop.f32.mrf.mxu0
    %v1129 = vadd.f32 %v1040, %v1128
    %1130 = vmatmul.bf16.gmra.mxu0 %v271
    %v1131 = vpop.f32.mrf.mxu0
    %v1132 = vadd.f32 %v1043, %v1131
    %v1133 = vpop.f32.mrf.mxu0
    %v1134 = vadd.f32 %v1045, %v1133
    %1135 = vmatmul.bf16.gmra.mxu0 %v273
    %v1136 = vpop.f32.mrf.mxu0
    %v1137 = vadd.f32 %v1048, %v1136
    %v1138 = vpop.f32.mrf.mxu0
    %v1139 = vadd.f32 %v1050, %v1138
    %1140 = vmatmul.bf16.gmra.mxu0 %v275
    %v1141 = vpop.f32.mrf.mxu0
    %v1142 = vadd.f32 %v1053, %v1141
    %v1143 = vpop.f32.mrf.mxu0
    %v1144 = vadd.f32 %v1055, %v1143
    %1145 = vmatmul.bf16.gmra.mxu0 %v277
    %v1146 = vpop.f32.mrf.mxu0
    %v1147 = vadd.f32 %v1058, %v1146
    %v1148 = vpop.f32.mrf.mxu0
    %v1149 = vadd.f32 %v1060, %v1148
    %1150 = vmatmul.bf16.gmra.mxu0 %v279
    %v1151 = vpop.f32.mrf.mxu0
    %v1152 = vadd.f32 %v1063, %v1151
    %v1153 = vpop.f32.mrf.mxu0
    %v1154 = vadd.f32 %v1065, %v1153
    %1155 = vmatmul.bf16.gmra.mxu0 %v281
    %v1156 = vpop.f32.mrf.mxu0
    %v1157 = vadd.f32 %v1068, %v1156
    %v1158 = vpop.f32.mrf.mxu0
    %v1159 = vadd.f32 %v1070, %v1158
    %1160 = vmatmul.bf16.gmra.mxu0 %v283
    %v1161 = vpop.f32.mrf.mxu0
    %v1162 = vadd.f32 %v1073, %v1161
    %v1163 = vpop.f32.mrf.mxu0
    %v1164 = vadd.f32 %v1075, %v1163
    %1165 = vmatmul.bf16.gmra.mxu0 %v285
    %v1166 = vpop.f32.mrf.mxu0
    %v1167 = vadd.f32 %v1078, %v1166
    %v1168 = vpop.f32.mrf.mxu0
    %v1169 = vadd.f32 %v1080, %v1168
    %1170 = vmatmul.bf16.gmra.mxu0 %v287
    %v1171 = vpop.f32.mrf.mxu0
    %v1172 = vadd.f32 %v1083, %v1171
    %v1173 = vpop.f32.mrf.mxu0
    %v1174 = vadd.f32 %v1085, %v1173
    %1175 = vmatmul.bf16.gmra.mxu0 %v289
    %v1176 = vpop.f32.mrf.mxu0
    %v1177 = vadd.f32 %v1088, %v1176
    %v1178 = vpop.f32.mrf.mxu0
    %v1179 = vadd.f32 %v1090, %v1178
    %1180 = vdwg.mxu0
    %1181 = vmatpush.msra.mxu0 %v112
    %1182 = vmatpush.msra.mxu0 %v111
    %1183 = vmatpush.msra.mxu0 %v110
    %1184 = vmatpush.msra.mxu0 %v109
    %1185 = vmatpush.msra.mxu0 %v108
    %1186 = vmatpush.msra.mxu0 %v107
    %1187 = vmatpush.msra.mxu0 %v106
    %1188 = vmatpush.msra.mxu0 %v105
    %1189 = vmatpush.msra.mxu0 %v104
    %1190 = vmatpush.msra.mxu0 %v103
    %1191 = vmatpush.msra.mxu0 %v102
    %1192 = vmatpush.msra.mxu0 %v101
    %1193 = vmatpush.msra.mxu0 %v100
    %1194 = vmatpush.msra.mxu0 %v99
    %1195 = vmatpush.msra.mxu0 %v98
    %1196 = vmatpush.msra.mxu0 %v97
    %1197 = vmatmul.f32.gmra.mxu0 %v1102
    %v1198 = vpop.f32.mrf.mxu0
    %v1199 = vadd.f32 %v501, %v1198
    %1200 = vmatmul.f32.gmra.mxu0 %v1104
    %v1201 = vpop.f32.mrf.mxu0
    %v1202 = vadd.f32 %v501, %v1201
    %1203 = vmatmul.f32.gmra.mxu0 %v1107
    %v1204 = vpop.f32.mrf.mxu0
    %v1205 = vadd.f32 %v501, %v1204
    %1206 = vmatmul.f32.gmra.mxu0 %v1109
    %v1207 = vpop.f32.mrf.mxu0
    %v1208 = vadd.f32 %v501, %v1207
    %1209 = vmatmul.f32.gmra.mxu0 %v1112
    %v1210 = vpop.f32.mrf.mxu0
    %v1211 = vadd.f32 %v501, %v1210
    %1212 = vmatmul.f32.gmra.mxu0 %v1114
    %v1213 = vpop.f32.mrf.mxu0
    %v1214 = vadd.f32 %v501, %v1213
    %1215 = vmatmul.f32.gmra.mxu0 %v1117
    %v1216 = vpop.f32.mrf.mxu0
    %v1217 = vadd.f32 %v501, %v1216
    %1218 = vmatmul.f32.gmra.mxu0 %v1119
    %v1219 = vpop.f32.mrf.mxu0
    %v1220 = vadd.f32 %v501, %v1219
    %1221 = vmatmul.f32.gmra.mxu0 %v1122
    %v1222 = vpop.f32.mrf.mxu0
    %v1223 = vadd.f32 %v501, %v1222
    %1224 = vmatmul.f32.gmra.mxu0 %v1124
    %v1225 = vpop.f32.mrf.mxu0
    %v1226 = vadd.f32 %v501, %v1225
    %1227 = vmatmul.f32.gmra.mxu0 %v1127
    %v1228 = vpop.f32.mrf.mxu0
    %v1229 = vadd.f32 %v501, %v1228
    %1230 = vmatmul.f32.gmra.mxu0 %v1129
    %v1231 = vpop.f32.mrf.mxu0
    %v1232 = vadd.f32 %v501, %v1231
    %1233 = vmatmul.f32.gmra.mxu0 %v1132
    %v1234 = vpop.f32.mrf.mxu0
    %v1235 = vadd.f32 %v501, %v1234
    %1236 = vmatmul.f32.gmra.mxu0 %v1134
    %v1237 = vpop.f32.mrf.mxu0
    %v1238 = vadd.f32 %v501, %v1237
    %1239 = vmatmul.f32.gmra.mxu0 %v1137
    %v1240 = vpop.f32.mrf.mxu0
    %v1241 = vadd.f32 %v501, %v1240
    %1242 = vmatmul.f32.gmra.mxu0 %v1139
    %v1243 = vpop.f32.mrf.mxu0
    %v1244 = vadd.f32 %v501, %v1243
    %1245 = vmatmul.f32.gmra.mxu0 %v1142
    %v1246 = vpop.f32.mrf.mxu0
    %v1247 = vadd.f32 %v501, %v1246
    %1248 = vmatmul.f32.gmra.mxu0 %v1144
    %v1249 = vpop.f32.mrf.mxu0
    %v1250 = vadd.f32 %v501, %v1249
    %1251 = vmatmul.f32.gmra.mxu0 %v1147
    %v1252 = vpop.f32.mrf.mxu0
    %v1253 = vadd.f32 %v501, %v1252
    %1254 = vmatmul.f32.gmra.mxu0 %v1149
    %v1255 = vpop.f32.mrf.mxu0
    %v1256 = vadd.f32 %v501, %v1255
    %1257 = vmatmul.f32.gmra.mxu0 %v1152
    %v1258 = vpop.f32.mrf.mxu0
    %v1259 = vadd.f32 %v501, %v1258
    %1260 = vmatmul.f32.gmra.mxu0 %v1154
    %v1261 = vpop.f32.mrf.mxu0
    %v1262 = vadd.f32 %v501, %v1261
    %1263 = vmatmul.f32.gmra.mxu0 %v1157
    %v1264 = vpop.f32.mrf.mxu0
    %v1265 = vadd.f32 %v501, %v1264
    %1266 = vmatmul.f32.gmra.mxu0 %v1159
    %v1267 = vpop.f32.mrf.mxu0
    %v1268 = vadd.f32 %v501, %v1267
    %1269 = vmatmul.f32.gmra.mxu0 %v1162
    %v1270 = vpop.f32.mrf.mxu0
    %v1271 = vadd.f32 %v501, %v1270
    %1272 = vmatmul.f32.gmra.mxu0 %v1164
    %v1273 = vpop.f32.mrf.mxu0
    %v1274 = vadd.f32 %v501, %v1273
    %1275 = vmatmul.f32.gmra.mxu0 %v1167
    %v1276 = vpop.f32.mrf.mxu0
    %v1277 = vadd.f32 %v501, %v1276
    %1278 = vmatmul.f32.gmra.mxu0 %v1169
    %v1279 = vpop.f32.mrf.mxu0
    %v1280 = vadd.f32 %v501, %v1279
    %1281 = vmatmul.f32.gmra.mxu0 %v1172
    %v1282 = vpop.f32.mrf.mxu0
    %v1283 = vadd.f32 %v501, %v1282
    %1284 = vmatmul.f32.gmra.mxu0 %v1174
    %v1285 = vpop.f32.mrf.mxu0
    %v1286 = vadd.f32 %v501, %v1285
    %1287 = vmatmul.f32.gmra.mxu0 %v1177
    %v1288 = vpop.f32.mrf.mxu0
    %v1289 = vadd.f32 %v501, %v1288
    %1290 = vmatmul.f32.gmra.mxu0 %v1179
    %v1291 = vpop.f32.mrf.mxu0
    %v1292 = vadd.f32 %v501, %v1291
    %1293 = vdwg.mxu0
    %1294 = vst [vmem:[#allocation8] sm:$0xff] %v1199
    %1295 = vst [vmem:[#allocation8 + $0x8] sm:$0xff] %v1202
    %1296 = vst [vmem:[#allocation8 + $0x10] sm:$0xff] %v1205
    %1297 = vst [vmem:[#allocation8 + $0x18] sm:$0xff] %v1208
    %1298 = vst [vmem:[#allocation8 + $0x20] sm:$0xff] %v1211
    %1299 = vst [vmem:[#allocation8 + $0x28] sm:$0xff] %v1214
    %1300 = vst [vmem:[#allocation8 + $0x30] sm:$0xff] %v1217
    %1301 = vst [vmem:[#allocation8 + $0x38] sm:$0xff] %v1220
    %1302 = vst [vmem:[#allocation8 + $0x40] sm:$0xff] %v1223
    %1303 = vst [vmem:[#allocation8 + $0x48] sm:$0xff] %v1226
    %1304 = vst [vmem:[#allocation8 + $0x50] sm:$0xff] %v1229
    %1305 = vst [vmem:[#allocation8 + $0x58] sm:$0xff] %v1232
    %1306 = vst [vmem:[#allocation8 + $0x60] sm:$0xff] %v1235
    %1307 = vst [vmem:[#allocation8 + $0x68] sm:$0xff] %v1238
    %1308 = vst [vmem:[#allocation8 + $0x70] sm:$0xff] %v1241
    %1309 = vst [vmem:[#allocation8 + $0x78] sm:$0xff] %v1244
    %1310 = vst [vmem:[#allocation8 + $0x80] sm:$0xff] %v1247
    %1311 = vst [vmem:[#allocation8 + $0x88] sm:$0xff] %v1250
    %1312 = vst [vmem:[#allocation8 + $0x90] sm:$0xff] %v1253
    %1313 = vst [vmem:[#allocation8 + $0x98] sm:$0xff] %v1256
    %1314 = vst [vmem:[#allocation8 + $0xa0] sm:$0xff] %v1259
    %1315 = vst [vmem:[#allocation8 + $0xa8] sm:$0xff] %v1262
    %1316 = vst [vmem:[#allocation8 + $0xb0] sm:$0xff] %v1265
    %1317 = vst [vmem:[#allocation8 + $0xb8] sm:$0xff] %v1268
    %1318 = vst [vmem:[#allocation8 + $0xc0] sm:$0xff] %v1271
    %1319 = vst [vmem:[#allocation8 + $0xc8] sm:$0xff] %v1274
    %1320 = vst [vmem:[#allocation8 + $0xd0] sm:$0xff] %v1277
    %1321 = vst [vmem:[#allocation8 + $0xd8] sm:$0xff] %v1280
    %1322 = vst [vmem:[#allocation8 + $0xe0] sm:$0xff] %v1283
    %1323 = vst [vmem:[#allocation8 + $0xe8] sm:$0xff] %v1286
    %1324 = vst [vmem:[#allocation8 + $0xf0] sm:$0xff] %v1289
    %1325 = vst [vmem:[#allocation8 + $0xf8] sm:$0xff] %v1292
    // Predicated region
    $region30: #{tpu_custom_call.1} parent=1 // pred_check
      _
    $region31: #{tpu_custom_call.1} parent=1 // pred_check_branch
      %1327 = sbr.rel (0) target = $region33
    $region32: #{tpu_custom_call.1} parent=1 // pred_region
      %1329 = vsyncadd [#allocation4], 0
      %s1330 = sshll.u32 [#allocation8], 4
      %s1331 = int_to_ptr.vmem [resolvable:$true] %s1330
      %s1332 = sshll.u32 %s4, 4
      %s1333 = int_to_ptr.hbm [resolvable:$true] %s1332
      %1338 = dma.vmem_to_hbm [thread:$0]  %s1331, 4096, %s1333, [#allocation4], 128, 128, 8
    $region33: #{tpu_custom_call.1} parent=1 // pred_fallthru
      _
    // Predicated region
    $region34: #{tpu_custom_call.1} parent=1 // pred_check
      _
    $region35: #{tpu_custom_call.1} parent=1 // pred_check_branch
      %1340 = sbr.rel (0) target = $region37
    $region36: #{tpu_custom_call.1} parent=1 // pred_region
      %1342 = dma.done [#allocation4], 4096
    $region37: #{tpu_custom_call.1} parent=1 // pred_fallthru
      _
    %1343 = vsyncpa [#allocation3], 1
    %1344 = vsyncpa [#allocation6], 1
    %1345 = vsyncpa [#allocation4], 1

</llo_original>
